<compile_context>
chip_gen: v7x
topology: tpu7x:2x2x1
jax: 0.10.0
libtpu: 0.0.40
codegen_flags: <defaults>
</compile_context>

<pallas_src>
import math

import jax
import jax.numpy as jnp
from jax.experimental import pallas as pl
from jax.experimental.pallas import tpu as pltpu


def _round_up(x, m):
    return (x + m - 1) // m * m


def fft_l1_kernel(pred_ref, targ_ref, wcat_ref, hcat2_ref, out_ref, ystack_ref):
    tb, Hp, W = pred_ref.shape
    Wf_pad = wcat_ref.shape[1] // 2

    # FFT is linear: |FFT(p) - FFT(t)| == |FFT(p - t)| -> transform the diff only.
    d = pred_ref[...] - targ_ref[...]               # (tb, Hp, W) bf16 (VPU)
    d2 = d.reshape(tb * Hp, W)                      # pure relabel (Hp % 8 == 0)

    # Stage 1: rFFT along W for all tb*Hp rows in ONE MXU matmul, fused [cos|sin].
    y = jnp.dot(d2, wcat_ref[...],
                preferred_element_type=jnp.float32)  # (tb*Hp, 2*Wf_pad) f32
    y16 = y.astype(jnp.bfloat16)

    # Re-pack to (2*Hp, tb*Wf_pad): rows = [Yr(h) ; Yi(h)], lanes = (batch, freq).
    # Folds the batch into the stage-2 N dimension (one big MXU matmul instead
    # of tb tiny ones).  Only static, 8/128-aligned slab stores.
    for b in range(tb):
        off = b * Wf_pad
        slab = y16[b * Hp:(b + 1) * Hp, :]                          # (Hp, 2*Wf_pad)
        ystack_ref[0:Hp, off:off + Wf_pad] = slab[:, :Wf_pad]       # Yr
        ystack_ref[Hp:2 * Hp, off:off + Wf_pad] = slab[:, Wf_pad:]  # Yi

    # Stage 2: full FFT along H.  [[C,-S],[S,C]] @ [Yr ; Yi] = [Re(Z) ; Im(Z)],
    # a single (2Hp, 2Hp) x (2Hp, tb*Wf_pad) matmul; no recombination needed.
    z = jnp.dot(hcat2_ref[...], ystack_ref[...],
                preferred_element_type=jnp.float32)  # (2*Hp, tb*Wf_pad) f32

    # Partial L1 sum.  Padded rows / lanes are exactly zero -> contribute 0.
    s = jnp.sum(jnp.abs(z))
    out_ref[...] = jnp.broadcast_to(s, out_ref.shape)


def fft_loss(predicted, target):
    """Equivalent of FFTLoss(nn.L1Loss())(predicted, target) for NCHW inputs."""
    B, C, H, W = predicted.shape
    BC = B * C
    Wf = W // 2 + 1
    Wf_pad = _round_up(Wf, 128)      # lane-dense frequency axis
    Hp = _round_up(H, 8)             # sublane-aligned row axis

    # bf16 inputs: halves HBM traffic and VMEM; MXU operands are bf16 anyway.
    pred = predicted.astype(jnp.bfloat16).reshape(BC, H, W)
    targ = target.astype(jnp.bfloat16).reshape(BC, H, W)

    # ---- choose per-step batch tb from a VMEM budget --------------------------
    # inputs (dbl-buffered) + d + y + ystack + z, per image, in bytes.
    per_img = 10 * Hp * W + 20 * Hp * Wf_pad
    fixed = 2 * W * 2 * Wf_pad + 2 * 4 * Hp * Hp            # twiddles (bf16)
    budget = 36 * 1024 * 1024                                # fits v7x 64 MiB VMEM
    tb = max(1, min(BC, (budget - fixed) // max(per_img, 1)))
    tb = min(tb, 64)                                         # bound unrolled stores
    m = 256 // math.gcd(Hp, 256)                             # tb*Hp % 256 == 0
    if tb >= m:
        tb = (tb // m) * m
    if tb >= BC and BC >= 16:                                # v7x: keep >=2 steps
        half = pl.cdiv(BC, 2)
        tb = max(1, min(tb, _round_up(half, m) if half >= m else half))
    tb = max(1, min(tb, BC))
    G = pl.cdiv(BC, tb)
    BCp = G * tb

    # Zero-pad batch and rows (zero diff -> zero contribution; padding is exact).
    pred = jnp.pad(pred, ((0, BCp - BC), (0, Hp - H), (0, 0)))
    targ = jnp.pad(targ, ((0, BCp - BC), (0, Hp - H), (0, 0)))

    # Stage-1 twiddles: rFFT along W, fused [cos | sin], zero-padded to Wf_pad.
    w = jnp.arange(W, dtype=jnp.float32)[:, None]
    v = jnp.arange(Wf, dtype=jnp.float32)[None, :]
    ang_w = -2.0 * jnp.pi * w * v / W
    cw = jnp.zeros((W, Wf_pad), jnp.float32).at[:, :Wf].set(jnp.cos(ang_w))
    sw = jnp.zeros((W, Wf_pad), jnp.float32).at[:, :Wf].set(jnp.sin(ang_w))
    wcat = jnp.concatenate([cw, sw], axis=1).astype(jnp.bfloat16)    # (W, 2*Wf_pad)

    # Stage-2 twiddles: full FFT along H as the real block matrix [[C,-S],[S,C]]
    # (C = cos(-2*pi*u*h/H), S = sin(-2*pi*u*h/H)), zero-padded to (2Hp, 2Hp).
    u = jnp.arange(H, dtype=jnp.float32)[:, None]
    h = jnp.arange(H, dtype=jnp.float32)[None, :]
    ang_h = -2.0 * jnp.pi * u * h / H
    ca = jnp.zeros((Hp, Hp), jnp.float32).at[:H, :H].set(jnp.cos(ang_h))
    sa = jnp.zeros((Hp, Hp), jnp.float32).at[:H, :H].set(jnp.sin(ang_h))
    hcat2 = jnp.block([[ca, -sa], [sa, ca]]).astype(jnp.bfloat16)    # (2Hp, 2Hp)

    n_flops = 4 * BCp * Hp * W * Wf_pad + 8 * Hp * Hp * BCp * Wf_pad
    n_bytes = 2 * BCp * Hp * W * 2 + W * 2 * Wf_pad * 2 + 4 * Hp * Hp * 2 + G * 128 * 4

    partials = pl.pallas_call(
        fft_l1_kernel,
        out_shape=jax.ShapeDtypeStruct((G, 1, 128), jnp.float32),
        grid_spec=pltpu.PrefetchScalarGridSpec(
            num_scalar_prefetch=0,
            grid=(G,),
            in_specs=[
                pl.BlockSpec((tb, Hp, W), lambda i: (i, 0, 0)),
                pl.BlockSpec((tb, Hp, W), lambda i: (i, 0, 0)),
                pl.BlockSpec((W, 2 * Wf_pad), lambda i: (0, 0),
                             pipeline_mode=pl.Buffered(1)),
                pl.BlockSpec((2 * Hp, 2 * Hp), lambda i: (0, 0),
                             pipeline_mode=pl.Buffered(1)),
            ],
            out_specs=pl.BlockSpec((1, 1, 128), lambda i: (i, 0, 0)),
            scratch_shapes=[pltpu.VMEM((2 * Hp, tb * Wf_pad), jnp.bfloat16)],
        ),
        compiler_params=pltpu.CompilerParams(
            dimension_semantics=("parallel",),
            vmem_limit_bytes=48 * 1024 * 1024),
        cost_estimate=pl.CostEstimate(
            flops=int(n_flops), transcendentals=0, bytes_accessed=int(n_bytes)),
    )(pred, targ, wcat, hcat2)

    total = jnp.sum(partials[:, 0, 0])
    n_elems = BC * H * Wf * 2        # mean over stacked (real, imag) of rfft2
    return total / n_elems


def fft_loss_ref(predicted, target):
    """Pure-JAX reference matching the PyTorch module."""
    pf = jnp.fft.rfft2(predicted.astype(jnp.float32))
    tf = jnp.fft.rfft2(target.astype(jnp.float32))
    ps = jnp.stack([pf.real, pf.imag], axis=-1)
    ts = jnp.stack([tf.real, tf.imag], axis=-1)
    return jnp.mean(jnp.abs(ps - ts))


if __name__ == "__main__":
    key = jax.random.PRNGKey(0)
    k1, k2 = jax.random.split(key)
    B, C, H, W = 2, 4, 16, 16
    predicted = jax.random.normal(k1, (B, C, H, W), dtype=jnp.float32)
    target = jax.random.normal(k2, (B, C, H, W), dtype=jnp.float32)

    loss = jax.block_until_ready(fft_loss(predicted, target))
    ref = jax.block_until_ready(fft_loss_ref(predicted, target))

    assert jnp.allclose(loss, ref, rtol=2e-2, atol=1e-3), (loss, ref)
    print("KERNEL_OK")
</pallas_src>

<mosaic_0001>
module attributes {stable_mosaic.version = 11 : i64} {
  func.func @fft_l1_kernel(%arg0: i32, %arg1: memref<8x16x16xbf16, #tpu.memory_space<vmem>>, %arg2: memref<8x16x16xbf16, #tpu.memory_space<vmem>>, %arg3: memref<16x256xbf16, #tpu.memory_space<vmem>>, %arg4: memref<32x32xbf16, #tpu.memory_space<vmem>>, %arg5: memref<1x1x128xf32, #tpu.memory_space<vmem>>, %arg6: memref<32x1024xbf16, #tpu.memory_space<vmem>>) attributes {dimension_semantics = [#tpu.dimension_semantics<parallel>], iteration_bounds = array<i64: 1>, scalar_prefetch = 0 : i64, scratch_operands = 1 : i64, tpu.core_type = #tpu.core_type<tc>, window_params = [{transform_indices = @transform_0, window_bounds = array<i64: 8, 16, 16>}, {transform_indices = @transform_1, window_bounds = array<i64: 8, 16, 16>}, {pipeline_mode = #tpu.pipeline_mode<synchronous>, transform_indices = @transform_2, window_bounds = array<i64: 16, 256>}, {pipeline_mode = #tpu.pipeline_mode<synchronous>, transform_indices = @transform_3, window_bounds = array<i64: 32, 32>}, {transform_indices = @transform_4, window_bounds = array<i64: 1, 1, 128>}]} {
    %c0 = arith.constant 0 : index
    %c0_0 = arith.constant 0 : index
    %c0_1 = arith.constant 0 : index
    %0 = vector.load %arg1[%c0, %c0_0, %c0_1] : memref<8x16x16xbf16, #tpu.memory_space<vmem>>, vector<8x16x16xbf16>
    %c0_2 = arith.constant 0 : index
    %c0_3 = arith.constant 0 : index
    %c0_4 = arith.constant 0 : index
    %1 = vector.load %arg2[%c0_2, %c0_3, %c0_4] : memref<8x16x16xbf16, #tpu.memory_space<vmem>>, vector<8x16x16xbf16>
    %2 = arith.subf %0, %1 : vector<8x16x16xbf16>
    %3 = vector.shape_cast %2 : vector<8x16x16xbf16> to vector<128x16xbf16>
    %c0_5 = arith.constant 0 : index
    %c0_6 = arith.constant 0 : index
    %4 = vector.load %arg3[%c0_5, %c0_6] : memref<16x256xbf16, #tpu.memory_space<vmem>>, vector<16x256xbf16>
    %cst = arith.constant dense<0.000000e+00> : vector<128x256xf32>
    %5 = tpu.matmul %3, %4, %cst {dimension_numbers = #tpu.dot_dimension_numbers<[1], [0], [0], [1], [0, 0, 1, 1], [], []>} : vector<128x16xbf16>, vector<16x256xbf16>, vector<128x256xf32> -> vector<128x256xf32>
    %6 = arith.truncf %5 : vector<128x256xf32> to vector<128x256xbf16>
    %7 = vector.extract_strided_slice %6 {offsets = [0, 0], sizes = [16, 256], strides = [1, 1]} : vector<128x256xbf16> to vector<16x256xbf16>
    %8 = vector.extract_strided_slice %7 {offsets = [0, 0], sizes = [16, 128], strides = [1, 1]} : vector<16x256xbf16> to vector<16x128xbf16>
    %c0_7 = arith.constant 0 : index
    %c0_8 = arith.constant 0 : index
    %9 = vector.load %arg6[%c0_7, %c0_8] : memref<32x1024xbf16, #tpu.memory_space<vmem>>, vector<16x128xbf16>
    tpu.vector_store %arg6[%c0_7, %c0_8], %8 {strides = array<i32>} : memref<32x1024xbf16, #tpu.memory_space<vmem>>, vector<16x128xbf16>,
    %10 = vector.extract_strided_slice %7 {offsets = [0, 128], sizes = [16, 128], strides = [1, 1]} : vector<16x256xbf16> to vector<16x128xbf16>
    %c16 = arith.constant 16 : index
    %c0_9 = arith.constant 0 : index
    %11 = vector.load %arg6[%c16, %c0_9] : memref<32x1024xbf16, #tpu.memory_space<vmem>>, vector<16x128xbf16>
    tpu.vector_store %arg6[%c16, %c0_9], %10 {strides = array<i32>} : memref<32x1024xbf16, #tpu.memory_space<vmem>>, vector<16x128xbf16>,
    %12 = vector.extract_strided_slice %6 {offsets = [16, 0], sizes = [16, 256], strides = [1, 1]} : vector<128x256xbf16> to vector<16x256xbf16>
    %13 = vector.extract_strided_slice %12 {offsets = [0, 0], sizes = [16, 128], strides = [1, 1]} : vector<16x256xbf16> to vector<16x128xbf16>
    %c0_10 = arith.constant 0 : index
    %c128 = arith.constant 128 : index
    %14 = vector.load %arg6[%c0_10, %c128] : memref<32x1024xbf16, #tpu.memory_space<vmem>>, vector<16x128xbf16>
    tpu.vector_store %arg6[%c0_10, %c128], %13 {strides = array<i32>} : memref<32x1024xbf16, #tpu.memory_space<vmem>>, vector<16x128xbf16>,
    %15 = vector.extract_strided_slice %12 {offsets = [0, 128], sizes = [16, 128], strides = [1, 1]} : vector<16x256xbf16> to vector<16x128xbf16>
    %c16_11 = arith.constant 16 : index
    %c128_12 = arith.constant 128 : index
    %16 = vector.load %arg6[%c16_11, %c128_12] : memref<32x1024xbf16, #tpu.memory_space<vmem>>, vector<16x128xbf16>
    tpu.vector_store %arg6[%c16_11, %c128_12], %15 {strides = array<i32>} : memref<32x1024xbf16, #tpu.memory_space<vmem>>, vector<16x128xbf16>,
    %17 = vector.extract_strided_slice %6 {offsets = [32, 0], sizes = [16, 256], strides = [1, 1]} : vector<128x256xbf16> to vector<16x256xbf16>
    %18 = vector.extract_strided_slice %17 {offsets = [0, 0], sizes = [16, 128], strides = [1, 1]} : vector<16x256xbf16> to vector<16x128xbf16>
    %c0_13 = arith.constant 0 : index
    %c256 = arith.constant 256 : index
    %19 = vector.load %arg6[%c0_13, %c256] : memref<32x1024xbf16, #tpu.memory_space<vmem>>, vector<16x128xbf16>
    tpu.vector_store %arg6[%c0_13, %c256], %18 {strides = array<i32>} : memref<32x1024xbf16, #tpu.memory_space<vmem>>, vector<16x128xbf16>,
    %20 = vector.extract_strided_slice %17 {offsets = [0, 128], sizes = [16, 128], strides = [1, 1]} : vector<16x256xbf16> to vector<16x128xbf16>
    %c16_14 = arith.constant 16 : index
    %c256_15 = arith.constant 256 : index
    %21 = vector.load %arg6[%c16_14, %c256_15] : memref<32x1024xbf16, #tpu.memory_space<vmem>>, vector<16x128xbf16>
    tpu.vector_store %arg6[%c16_14, %c256_15], %20 {strides = array<i32>} : memref<32x1024xbf16, #tpu.memory_space<vmem>>, vector<16x128xbf16>,
    %22 = vector.extract_strided_slice %6 {offsets = [48, 0], sizes = [16, 256], strides = [1, 1]} : vector<128x256xbf16> to vector<16x256xbf16>
    %23 = vector.extract_strided_slice %22 {offsets = [0, 0], sizes = [16, 128], strides = [1, 1]} : vector<16x256xbf16> to vector<16x128xbf16>
    %c0_16 = arith.constant 0 : index
    %c384 = arith.constant 384 : index
    %24 = vector.load %arg6[%c0_16, %c384] : memref<32x1024xbf16, #tpu.memory_space<vmem>>, vector<16x128xbf16>
    tpu.vector_store %arg6[%c0_16, %c384], %23 {strides = array<i32>} : memref<32x1024xbf16, #tpu.memory_space<vmem>>, vector<16x128xbf16>,
    %25 = vector.extract_strided_slice %22 {offsets = [0, 128], sizes = [16, 128], strides = [1, 1]} : vector<16x256xbf16> to vector<16x128xbf16>
    %c16_17 = arith.constant 16 : index
    %c384_18 = arith.constant 384 : index
    %26 = vector.load %arg6[%c16_17, %c384_18] : memref<32x1024xbf16, #tpu.memory_space<vmem>>, vector<16x128xbf16>
    tpu.vector_store %arg6[%c16_17, %c384_18], %25 {strides = array<i32>} : memref<32x1024xbf16, #tpu.memory_space<vmem>>, vector<16x128xbf16>,
    %27 = vector.extract_strided_slice %6 {offsets = [64, 0], sizes = [16, 256], strides = [1, 1]} : vector<128x256xbf16> to vector<16x256xbf16>
    %28 = vector.extract_strided_slice %27 {offsets = [0, 0], sizes = [16, 128], strides = [1, 1]} : vector<16x256xbf16> to vector<16x128xbf16>
    %c0_19 = arith.constant 0 : index
    %c512 = arith.constant 512 : index
    %29 = vector.load %arg6[%c0_19, %c512] : memref<32x1024xbf16, #tpu.memory_space<vmem>>, vector<16x128xbf16>
    tpu.vector_store %arg6[%c0_19, %c512], %28 {strides = array<i32>} : memref<32x1024xbf16, #tpu.memory_space<vmem>>, vector<16x128xbf16>,
    %30 = vector.extract_strided_slice %27 {offsets = [0, 128], sizes = [16, 128], strides = [1, 1]} : vector<16x256xbf16> to vector<16x128xbf16>
    %c16_20 = arith.constant 16 : index
    %c512_21 = arith.constant 512 : index
    %31 = vector.load %arg6[%c16_20, %c512_21] : memref<32x1024xbf16, #tpu.memory_space<vmem>>, vector<16x128xbf16>
    tpu.vector_store %arg6[%c16_20, %c512_21], %30 {strides = array<i32>} : memref<32x1024xbf16, #tpu.memory_space<vmem>>, vector<16x128xbf16>,
    %32 = vector.extract_strided_slice %6 {offsets = [80, 0], sizes = [16, 256], strides = [1, 1]} : vector<128x256xbf16> to vector<16x256xbf16>
    %33 = vector.extract_strided_slice %32 {offsets = [0, 0], sizes = [16, 128], strides = [1, 1]} : vector<16x256xbf16> to vector<16x128xbf16>
    %c0_22 = arith.constant 0 : index
    %c640 = arith.constant 640 : index
    %34 = vector.load %arg6[%c0_22, %c640] : memref<32x1024xbf16, #tpu.memory_space<vmem>>, vector<16x128xbf16>
    tpu.vector_store %arg6[%c0_22, %c640], %33 {strides = array<i32>} : memref<32x1024xbf16, #tpu.memory_space<vmem>>, vector<16x128xbf16>,
    %35 = vector.extract_strided_slice %32 {offsets = [0, 128], sizes = [16, 128], strides = [1, 1]} : vector<16x256xbf16> to vector<16x128xbf16>
    %c16_23 = arith.constant 16 : index
    %c640_24 = arith.constant 640 : index
    %36 = vector.load %arg6[%c16_23, %c640_24] : memref<32x1024xbf16, #tpu.memory_space<vmem>>, vector<16x128xbf16>
    tpu.vector_store %arg6[%c16_23, %c640_24], %35 {strides = array<i32>} : memref<32x1024xbf16, #tpu.memory_space<vmem>>, vector<16x128xbf16>,
    %37 = vector.extract_strided_slice %6 {offsets = [96, 0], sizes = [16, 256], strides = [1, 1]} : vector<128x256xbf16> to vector<16x256xbf16>
    %38 = vector.extract_strided_slice %37 {offsets = [0, 0], sizes = [16, 128], strides = [1, 1]} : vector<16x256xbf16> to vector<16x128xbf16>
    %c0_25 = arith.constant 0 : index
    %c768 = arith.constant 768 : index
    %39 = vector.load %arg6[%c0_25, %c768] : memref<32x1024xbf16, #tpu.memory_space<vmem>>, vector<16x128xbf16>
    tpu.vector_store %arg6[%c0_25, %c768], %38 {strides = array<i32>} : memref<32x1024xbf16, #tpu.memory_space<vmem>>, vector<16x128xbf16>,
    %40 = vector.extract_strided_slice %37 {offsets = [0, 128], sizes = [16, 128], strides = [1, 1]} : vector<16x256xbf16> to vector<16x128xbf16>
    %c16_26 = arith.constant 16 : index
    %c768_27 = arith.constant 768 : index
    %41 = vector.load %arg6[%c16_26, %c768_27] : memref<32x1024xbf16, #tpu.memory_space<vmem>>, vector<16x128xbf16>
    tpu.vector_store %arg6[%c16_26, %c768_27], %40 {strides = array<i32>} : memref<32x1024xbf16, #tpu.memory_space<vmem>>, vector<16x128xbf16>,
    %42 = vector.extract_strided_slice %6 {offsets = [112, 0], sizes = [16, 256], strides = [1, 1]} : vector<128x256xbf16> to vector<16x256xbf16>
    %43 = vector.extract_strided_slice %42 {offsets = [0, 0], sizes = [16, 128], strides = [1, 1]} : vector<16x256xbf16> to vector<16x128xbf16>
    %c0_28 = arith.constant 0 : index
    %c896 = arith.constant 896 : index
    %44 = vector.load %arg6[%c0_28, %c896] : memref<32x1024xbf16, #tpu.memory_space<vmem>>, vector<16x128xbf16>
    tpu.vector_store %arg6[%c0_28, %c896], %43 {strides = array<i32>} : memref<32x1024xbf16, #tpu.memory_space<vmem>>, vector<16x128xbf16>,
    %45 = vector.extract_strided_slice %42 {offsets = [0, 128], sizes = [16, 128], strides = [1, 1]} : vector<16x256xbf16> to vector<16x128xbf16>
    %c16_29 = arith.constant 16 : index
    %c896_30 = arith.constant 896 : index
    %46 = vector.load %arg6[%c16_29, %c896_30] : memref<32x1024xbf16, #tpu.memory_space<vmem>>, vector<16x128xbf16>
    tpu.vector_store %arg6[%c16_29, %c896_30], %45 {strides = array<i32>} : memref<32x1024xbf16, #tpu.memory_space<vmem>>, vector<16x128xbf16>,
    %c0_31 = arith.constant 0 : index
    %c0_32 = arith.constant 0 : index
    %47 = vector.load %arg4[%c0_31, %c0_32] : memref<32x32xbf16, #tpu.memory_space<vmem>>, vector<32x32xbf16>
    %c0_33 = arith.constant 0 : index
    %c0_34 = arith.constant 0 : index
    %48 = vector.load %arg6[%c0_33, %c0_34] : memref<32x1024xbf16, #tpu.memory_space<vmem>>, vector<32x1024xbf16>
    %cst_35 = arith.constant dense<0.000000e+00> : vector<32x1024xf32>
    %49 = tpu.matmul %47, %48, %cst_35 {dimension_numbers = #tpu.dot_dimension_numbers<[1], [0], [0], [1], [0, 0, 1, 1], [], []>} : vector<32x32xbf16>, vector<32x1024xbf16>, vector<32x1024xf32> -> vector<32x1024xf32>
    %50 = math.absf %49 : vector<32x1024xf32>
    %51 = vector.shape_cast %50 : vector<32x1024xf32> to vector<1x32x1024xf32>
    %cst_36 = arith.constant dense<0.000000e+00> : vector<1xf32>
    %52 = vector.multi_reduction <add>, %51, %cst_36 [1, 2] : vector<1x32x1024xf32> to vector<1xf32>
    %53 = vector.shape_cast %52 : vector<1xf32> to vector<1x1x1xf32>
    %54 = vector.extract %53[0, 0, 0] : f32 from vector<1x1x1xf32>
    %55 = vector.broadcast %54 : f32 to vector<1x1x128xf32>
    %c0_37 = arith.constant 0 : index
    %c0_38 = arith.constant 0 : index
    %c0_39 = arith.constant 0 : index
    %56 = vector.load %arg5[%c0_37, %c0_38, %c0_39] : memref<1x1x128xf32, #tpu.memory_space<vmem>>, vector<1x1x128xf32>
    tpu.vector_store %arg5[%c0_37, %c0_38, %c0_39], %55 {strides = array<i32>} : memref<1x1x128xf32, #tpu.memory_space<vmem>>, vector<1x1x128xf32>,
    return
  }
  func.func @transform_0(%arg0: i32) -> (i32, i32, i32) {
    %c0_i32 = arith.constant 0 : i32
    %c0_i32_0 = arith.constant 0 : i32
    %c0_i32_1 = arith.constant 0 : i32
    return %arg0, %c0_i32, %c0_i32_0 : i32, i32, i32
  }
  func.func @transform_1(%arg0: i32) -> (i32, i32, i32) {
    %c0_i32 = arith.constant 0 : i32
    %c0_i32_0 = arith.constant 0 : i32
    %c0_i32_1 = arith.constant 0 : i32
    return %arg0, %c0_i32, %c0_i32_0 : i32, i32, i32
  }
  func.func @transform_2(%arg0: i32) -> (i32, i32) {
    %c0_i32 = arith.constant 0 : i32
    %c0_i32_0 = arith.constant 0 : i32
    %c0_i32_1 = arith.constant 0 : i32
    return %c0_i32, %c0_i32_0 : i32, i32
  }
  func.func @transform_3(%arg0: i32) -> (i32, i32) {
    %c0_i32 = arith.constant 0 : i32
    %c0_i32_0 = arith.constant 0 : i32
    %c0_i32_1 = arith.constant 0 : i32
    return %c0_i32, %c0_i32_0 : i32, i32
  }
  func.func @transform_4(%arg0: i32) -> (i32, i32, i32) {
    %c0_i32 = arith.constant 0 : i32
    %c0_i32_0 = arith.constant 0 : i32
    %c0_i32_1 = arith.constant 0 : i32
    return %arg0, %c0_i32, %c0_i32_0 : i32, i32, i32
  }
}

</mosaic_0001>

<llo_original>
// kernel: tpu_custom_call.1
$region0: #{tpu_custom_call.1}
  #allocation0 [shape = 'u32[]', space=smem, size = 0x4, offset = 0x4, fixed_abs, tag = 'smem constant byte address 0x4 - core index']
  #allocation1 [shape = 'u32[144,128]{1,0:T(1,128)}', space=vmem, size = 0x12000, scoped, tag = 'internal scratch']
  #allocation2 [shape = 'bf16[32,1024]{1,0:T(16,128)(2,1)}', space=vmem, size = 0x10000, scoped, tag = 'scratch operand']
  %s0 = inlined_call_operand.hbm [shape: bf16[8,16,16], index: 0, kind: input, shape index: {}]
  %s1 = inlined_call_operand.hbm [shape: bf16[8,16,16], index: 1, kind: input, shape index: {}]
  %s2 = inlined_call_operand.hbm [shape: bf16[16,256], index: 2, kind: input, shape index: {}]
  %s3 = inlined_call_operand.hbm [shape: bf16[32,32], index: 3, kind: input, shape index: {}]
  %s4 = inlined_call_operand.hbm [shape: f32[1,1,128], index: 4, kind: output, shape index: {}]
  %s5 = sld [smem:[#allocation0]]
  $region42: #{tpu_custom_call.1} parent=0
    _
  %s7 = ssub.s32 1, %s5
  %s8 = scalar_select 0, %s7, %s5
  $region1: #{tpu_custom_call.1} parent=0
    #allocation3 [shape = 'u8[32768]{0}', space=vmem, size = 0x8000, scoped, tag = 'input window, operand 0, single buffered']
    #allocation4 [shape = 's32[1]{0}', space=sflag, size = 0x4, scoped, tag = 'scoped memory for tpu_custom_call.1']
    #allocation5 [shape = 's32[1]{0}', space=sflag, size = 0x4, scoped, tag = 'scoped memory for tpu_custom_call.1']
    #allocation6 [shape = 'u8[32768]{0}', space=vmem, size = 0x8000, scoped, tag = 'input window, operand 1, single buffered']
    #allocation7 [shape = 's32[1]{0}', space=sflag, size = 0x4, scoped, tag = 'scoped memory for tpu_custom_call.1']
    #allocation8 [shape = 'u8[8192]{0}', space=vmem, size = 0x2000, scoped, tag = 'input window, operand 2, single buffered']
    #allocation9 [shape = 'u8[8192]{0}', space=vmem, size = 0x2000, scoped, tag = 'input window, operand 3, single buffered']
    #allocation10 [shape = 's32[1]{0}', space=sflag, size = 0x4, scoped, tag = 'scoped memory for tpu_custom_call.1']
    #allocation11 [shape = 'u8[512]{0}', space=vmem, size = 0x400, scoped, tag = 'output window, operand 0, single buffered']
    %9 = vsyncpa [#allocation4], 0
    %10 = vsyncpa [#allocation7], 0
    %11 = vsyncpa [#allocation10], 0
    %12 = vsyncpa [#allocation5], 0
    // Predicated region
    $region2: #{tpu_custom_call.1} parent=1 // pred_check
      _
    $region3: #{tpu_custom_call.1} parent=1 // pred_check_branch
      %14 = sbr.rel (0) target = $region5
    $region4: #{tpu_custom_call.1} parent=1 // pred_region
      %s16 = ssub.s32 1024, 1024
      %17 = vsyncadd [#allocation4], %s16
      %s18 = sshll.u32 [#allocation3], 4
      %s19 = int_to_ptr.vmem [resolvable:$true] %s18
      %24 = dma.hbm_to_vmem [thread:$0]  %s0, 1024, %s19, [#allocation4], 64, 64, 4
    $region5: #{tpu_custom_call.1} parent=1 // pred_fallthru
      _
    // Predicated region
    $region6: #{tpu_custom_call.1} parent=1 // pred_check
      _
    $region7: #{tpu_custom_call.1} parent=1 // pred_check_branch
      %26 = sbr.rel (0) target = $region9
    $region8: #{tpu_custom_call.1} parent=1 // pred_region
      %s28 = ssub.s32 1024, 1024
      %29 = vsyncadd [#allocation7], %s28
      %s30 = sshll.u32 [#allocation6], 4
      %s31 = int_to_ptr.vmem [resolvable:$true] %s30
      %36 = dma.hbm_to_vmem [thread:$0]  %s1, 1024, %s31, [#allocation7], 64, 64, 4
    $region9: #{tpu_custom_call.1} parent=1 // pred_fallthru
      _
    // Predicated region
    $region10: #{tpu_custom_call.1} parent=1 // pred_check
      _
    $region11: #{tpu_custom_call.1} parent=1 // pred_check_branch
      %38 = sbr.rel (0) target = $region13
    $region12: #{tpu_custom_call.1} parent=1 // pred_region
      %s40 = ssub.s32 256, 256
      %41 = vsyncadd [#allocation7], %s40
      %s42 = sshll.u32 [#allocation8], 4
      %s43 = int_to_ptr.vmem [resolvable:$true] %s42
      %48 = dma.hbm_to_vmem [thread:$0]  %s2, 256, %s43, [#allocation7], 128, 128, 8
    $region13: #{tpu_custom_call.1} parent=1 // pred_fallthru
      _
    // Predicated region
    $region14: #{tpu_custom_call.1} parent=1 // pred_check
      _
    $region15: #{tpu_custom_call.1} parent=1 // pred_check_branch
      %50 = sbr.rel (0) target = $region17
    $region16: #{tpu_custom_call.1} parent=1 // pred_region
      %s52 = ssub.s32 256, 256
      %53 = vsyncadd [#allocation10], %s52
      %s54 = sshll.u32 [#allocation9], 4
      %s55 = int_to_ptr.vmem [resolvable:$true] %s54
      %60 = dma.hbm_to_vmem [thread:$0]  %s3, 256, %s55, [#allocation10], 64, 64, 4
    $region17: #{tpu_custom_call.1} parent=1 // pred_fallthru
      _
    // Predicated region
    $region18: #{tpu_custom_call.1} parent=1 // pred_check
      _
    $region19: #{tpu_custom_call.1} parent=1 // pred_check_branch
      %62 = sbr.rel (0) target = $region21
    $region20: #{tpu_custom_call.1} parent=1 // pred_region
      %63 = dma.done [#allocation4], 1024
    $region21: #{tpu_custom_call.1} parent=1 // pred_fallthru
      _
    // Predicated region
    $region22: #{tpu_custom_call.1} parent=1 // pred_check
      _
    $region23: #{tpu_custom_call.1} parent=1 // pred_check_branch
      %65 = sbr.rel (0) target = $region25
    $region24: #{tpu_custom_call.1} parent=1 // pred_region
      %66 = dma.done [#allocation7], 1024
    $region25: #{tpu_custom_call.1} parent=1 // pred_fallthru
      _
    // Predicated region
    $region26: #{tpu_custom_call.1} parent=1 // pred_check
      _
    $region27: #{tpu_custom_call.1} parent=1 // pred_check_branch
      %68 = sbr.rel (0) target = $region29
    $region28: #{tpu_custom_call.1} parent=1 // pred_region
      %69 = dma.done [#allocation7], 256
    $region29: #{tpu_custom_call.1} parent=1 // pred_fallthru
      _
    // Predicated region
    $region30: #{tpu_custom_call.1} parent=1 // pred_check
      _
    $region31: #{tpu_custom_call.1} parent=1 // pred_check_branch
      %71 = sbr.rel (0) target = $region33
    $region32: #{tpu_custom_call.1} parent=1 // pred_region
      %72 = dma.done [#allocation10], 256
    $region33: #{tpu_custom_call.1} parent=1 // pred_fallthru
      _
    %v74 = vld [vmem:[#allocation3] sm:$0xf]
    %v75 = vld [vmem:[#allocation3 + $0x4] sm:$0xf]
    %v76 = vld [vmem:[#allocation3 + $0x8] sm:$0xf]
    %v77 = vld [vmem:[#allocation3 + $0xc] sm:$0xf]
    %v78 = vld [vmem:[#allocation3 + $0x10] sm:$0xf]
    %v79 = vld [vmem:[#allocation3 + $0x14] sm:$0xf]
    %v80 = vld [vmem:[#allocation3 + $0x18] sm:$0xf]
    %v81 = vld [vmem:[#allocation3 + $0x1c] sm:$0xf]
    %v82 = vld [vmem:[#allocation3 + $0x20] sm:$0xf]
    %v83 = vld [vmem:[#allocation3 + $0x24] sm:$0xf]
    %v84 = vld [vmem:[#allocation3 + $0x28] sm:$0xf]
    %v85 = vld [vmem:[#allocation3 + $0x2c] sm:$0xf]
    %v86 = vld [vmem:[#allocation3 + $0x30] sm:$0xf]
    %v87 = vld [vmem:[#allocation3 + $0x34] sm:$0xf]
    %v88 = vld [vmem:[#allocation3 + $0x38] sm:$0xf]
    %v89 = vld [vmem:[#allocation3 + $0x3c] sm:$0xf]
    %v90 = vld [vmem:[#allocation6] sm:$0xf]
    %v91 = vld [vmem:[#allocation6 + $0x4] sm:$0xf]
    %v92 = vld [vmem:[#allocation6 + $0x8] sm:$0xf]
    %v93 = vld [vmem:[#allocation6 + $0xc] sm:$0xf]
    %v94 = vld [vmem:[#allocation6 + $0x10] sm:$0xf]
    %v95 = vld [vmem:[#allocation6 + $0x14] sm:$0xf]
    %v96 = vld [vmem:[#allocation6 + $0x18] sm:$0xf]
    %v97 = vld [vmem:[#allocation6 + $0x1c] sm:$0xf]
    %v98 = vld [vmem:[#allocation6 + $0x20] sm:$0xf]
    %v99 = vld [vmem:[#allocation6 + $0x24] sm:$0xf]
    %v100 = vld [vmem:[#allocation6 + $0x28] sm:$0xf]
    %v101 = vld [vmem:[#allocation6 + $0x2c] sm:$0xf]
    %v102 = vld [vmem:[#allocation6 + $0x30] sm:$0xf]
    %v103 = vld [vmem:[#allocation6 + $0x34] sm:$0xf]
    %v104 = vld [vmem:[#allocation6 + $0x38] sm:$0xf]
    %v105 = vld [vmem:[#allocation6 + $0x3c] sm:$0xf]
    %v106 = vsub.bf16 %v74, %v90
    %v107 = vsub.bf16 %v75, %v91
    %v108 = vsub.bf16 %v76, %v92
    %v109 = vsub.bf16 %v77, %v93
    %v110 = vsub.bf16 %v78, %v94
    %v111 = vsub.bf16 %v79, %v95
    %v112 = vsub.bf16 %v80, %v96
    %v113 = vsub.bf16 %v81, %v97
    %v114 = vsub.bf16 %v82, %v98
    %v115 = vsub.bf16 %v83, %v99
    %v116 = vsub.bf16 %v84, %v100
    %v117 = vsub.bf16 %v85, %v101
    %v118 = vsub.bf16 %v86, %v102
    %v119 = vsub.bf16 %v87, %v103
    %v120 = vsub.bf16 %v88, %v104
    %v121 = vsub.bf16 %v89, %v105
    %v122 = vld [vmem:[#allocation8] sm:$0xff]
    %v123 = vld [vmem:[#allocation8 + $0x8] sm:$0xff]
    %v140 = vunpack.c.l.b16 %v106
    %v141 = vunpack.c.l.b16 %v107
    %v142 = vunpack.c.l.b16 %v108
    %v143 = vunpack.c.l.b16 %v109
    %v144 = vunpack.c.l.b16 %v110
    %v145 = vunpack.c.l.b16 %v111
    %v146 = vunpack.c.l.b16 %v112
    %v147 = vunpack.c.l.b16 %v113
    %v148 = vunpack.c.l.b16 %v114
    %v149 = vunpack.c.l.b16 %v115
    %v150 = vunpack.c.l.b16 %v116
    %v151 = vunpack.c.l.b16 %v117
    %v152 = vunpack.c.l.b16 %v118
    %v153 = vunpack.c.l.b16 %v119
    %v154 = vunpack.c.l.b16 %v120
    %v155 = vunpack.c.l.b16 %v121
    %v156 = vpack.c.b16 %v141, %v140
    %v157 = vpack.c.b16 %v143, %v142
    %v158 = vpack.c.b16 %v145, %v144
    %v159 = vpack.c.b16 %v147, %v146
    %v160 = vpack.c.b16 %v149, %v148
    %v161 = vpack.c.b16 %v151, %v150
    %v162 = vpack.c.b16 %v153, %v152
    %v163 = vpack.c.b16 %v155, %v154
    %v166 = vunpack.c.l.b16 %v122
    %v167 = vunpack.c.h.b16 %v122
    %v168 = vunpack.c.l.b16 %v123
    %v169 = vunpack.c.h.b16 %v123
    %v170 = vpack.c.b16 %v168, %v166
    %v171 = vpack.c.b16 %v169, %v167
    %vm174 = vcmask 130048
    %v176 = vsel %vm174, %v156, 0
    %v179 = vsel %vm174, %v157, 0
    %v182 = vsel %vm174, %v158, 0
    %v185 = vsel %vm174, %v159, 0
    %v188 = vsel %vm174, %v160, 0
    %v191 = vsel %vm174, %v161, 0
    %v194 = vsel %vm174, %v162, 0
    %v197 = vsel %vm174, %v163, 0
    %199 = vmatprep.subr.bf16.mxu0 %v171
    %200 = vmatpush1.bf16.msra.mxu0 %v170
    %201 = vmatprep.subr.bf16.mxu0 0
    %202 = vmatpush1.bf16.msra.mxu0 0
    %203 = vmatprep.subr.bf16.mxu0 0
    %204 = vmatpush1.bf16.msra.mxu0 0
    %205 = vmatprep.subr.bf16.mxu0 0
    %206 = vmatpush1.bf16.msra.mxu0 0
    %207 = vmatprep.subr.bf16.mxu0 0
    %208 = vmatpush1.bf16.msra.mxu0 0
    %209 = vmatprep.subr.bf16.mxu0 0
    %210 = vmatpush1.bf16.msra.mxu0 0
    %211 = vmatprep.subr.bf16.mxu0 0
    %212 = vmatpush1.bf16.msra.mxu0 0
    %213 = vmatprep.subr.bf16.mxu0 0
    %214 = vmatpush1.bf16.msra.mxu0 0
    %215 = vmatprep.subr.bf16.mxu0 0
    %216 = vmatpush1.bf16.msra.mxu0 0
    %217 = vmatprep.subr.bf16.mxu0 0
    %218 = vmatpush1.bf16.msra.mxu0 0
    %219 = vmatprep.subr.bf16.mxu0 0
    %220 = vmatpush1.bf16.msra.mxu0 0
    %221 = vmatprep.subr.bf16.mxu0 0
    %222 = vmatpush1.bf16.msra.mxu0 0
    %223 = vmatprep.subr.bf16.mxu0 0
    %224 = vmatpush1.bf16.msra.mxu0 0
    %225 = vmatprep.subr.bf16.mxu0 0
    %226 = vmatpush1.bf16.msra.mxu0 0
    %227 = vmatprep.subr.bf16.mxu0 0
    %228 = vmatpush1.bf16.msra.mxu0 0
    %229 = vmatprep.subr.bf16.mxu0 0
    %230 = vmatpush1.bf16.msra.mxu0 0
    %231 = vmatprep.mubr.bf16.mxu0 0
    %232 = vmatmul.mubr.bf16.gmra.mrb[0].mxu0 %v176
    %v233 = vpop.f32.mrb[0].mxu0
    %v234 = vadd.f32 0.0, %v233
    %v235 = vpop.f32.mrb[0].mxu0
    %v236 = vadd.f32 0.0, %v235
    %v237 = vpop.f32.mrb[0].mxu0
    %v238 = vadd.f32 0.0, %v237
    %v239 = vpop.f32.mrb[0].mxu0
    %v240 = vadd.f32 0.0, %v239
    %241 = vmatprep.mubr.bf16.mxu0 0
    %242 = vmatmul.mubr.bf16.gmra.mrb[0].mxu0 %v179
    %v243 = vpop.f32.mrb[0].mxu0
    %v244 = vadd.f32 0.0, %v243
    %v245 = vpop.f32.mrb[0].mxu0
    %v246 = vadd.f32 0.0, %v245
    %v247 = vpop.f32.mrb[0].mxu0
    %v248 = vadd.f32 0.0, %v247
    %v249 = vpop.f32.mrb[0].mxu0
    %v250 = vadd.f32 0.0, %v249
    %251 = vmatprep.mubr.bf16.mxu0 0
    %252 = vmatmul.mubr.bf16.gmra.mrb[0].mxu0 %v182
    %v253 = vpop.f32.mrb[0].mxu0
    %v254 = vadd.f32 0.0, %v253
    %v255 = vpop.f32.mrb[0].mxu0
    %v256 = vadd.f32 0.0, %v255
    %v257 = vpop.f32.mrb[0].mxu0
    %v258 = vadd.f32 0.0, %v257
    %v259 = vpop.f32.mrb[0].mxu0
    %v260 = vadd.f32 0.0, %v259
    %261 = vmatprep.mubr.bf16.mxu0 0
    %262 = vmatmul.mubr.bf16.gmra.mrb[0].mxu0 %v185
    %v263 = vpop.f32.mrb[0].mxu0
    %v264 = vadd.f32 0.0, %v263
    %v265 = vpop.f32.mrb[0].mxu0
    %v266 = vadd.f32 0.0, %v265
    %v267 = vpop.f32.mrb[0].mxu0
    %v268 = vadd.f32 0.0, %v267
    %v269 = vpop.f32.mrb[0].mxu0
    %v270 = vadd.f32 0.0, %v269
    %271 = vmatprep.mubr.bf16.mxu0 0
    %272 = vmatmul.mubr.bf16.gmra.mrb[0].mxu0 %v188
    %v273 = vpop.f32.mrb[0].mxu0
    %v274 = vadd.f32 0.0, %v273
    %v275 = vpop.f32.mrb[0].mxu0
    %v276 = vadd.f32 0.0, %v275
    %v277 = vpop.f32.mrb[0].mxu0
    %v278 = vadd.f32 0.0, %v277
    %v279 = vpop.f32.mrb[0].mxu0
    %v280 = vadd.f32 0.0, %v279
    %281 = vmatprep.mubr.bf16.mxu0 0
    %282 = vmatmul.mubr.bf16.gmra.mrb[0].mxu0 %v191
    %v283 = vpop.f32.mrb[0].mxu0
    %v284 = vadd.f32 0.0, %v283
    %v285 = vpop.f32.mrb[0].mxu0
    %v286 = vadd.f32 0.0, %v285
    %v287 = vpop.f32.mrb[0].mxu0
    %v288 = vadd.f32 0.0, %v287
    %v289 = vpop.f32.mrb[0].mxu0
    %v290 = vadd.f32 0.0, %v289
    %291 = vmatprep.mubr.bf16.mxu0 0
    %292 = vmatmul.mubr.bf16.gmra.mrb[0].mxu0 %v194
    %v293 = vpop.f32.mrb[0].mxu0
    %v294 = vadd.f32 0.0, %v293
    %v295 = vpop.f32.mrb[0].mxu0
    %v296 = vadd.f32 0.0, %v295
    %v297 = vpop.f32.mrb[0].mxu0
    %v298 = vadd.f32 0.0, %v297
    %v299 = vpop.f32.mrb[0].mxu0
    %v300 = vadd.f32 0.0, %v299
    %301 = vmatprep.mubr.bf16.mxu0 0
    %302 = vmatmul.mubr.bf16.gmra.mrb[0].mxu0 %v197
    %v303 = vpop.f32.mrb[0].mxu0
    %v304 = vadd.f32 0.0, %v303
    %v305 = vpop.f32.mrb[0].mxu0
    %v306 = vadd.f32 0.0, %v305
    %v307 = vpop.f32.mrb[0].mxu0
    %v308 = vadd.f32 0.0, %v307
    %v309 = vpop.f32.mrb[0].mxu0
    %v310 = vadd.f32 0.0, %v309
    %311 = vdwg.mxu0
    %v312 = vpack.c.bf16 %v238, %v234
    %v313 = vpack.c.bf16 %v240, %v236
    %v314 = vpack.c.bf16 %v248, %v244
    %v315 = vpack.c.bf16 %v250, %v246
    %v316 = vpack.c.bf16 %v258, %v254
    %v317 = vpack.c.bf16 %v260, %v256
    %v318 = vpack.c.bf16 %v268, %v264
    %v319 = vpack.c.bf16 %v270, %v266
    %v320 = vpack.c.bf16 %v278, %v274
    %v321 = vpack.c.bf16 %v280, %v276
    %v322 = vpack.c.bf16 %v288, %v284
    %v323 = vpack.c.bf16 %v290, %v286
    %v324 = vpack.c.bf16 %v298, %v294
    %v325 = vpack.c.bf16 %v300, %v296
    %v326 = vpack.c.bf16 %v308, %v304
    %v327 = vpack.c.bf16 %v310, %v306
    %328 = vst [vmem:[#allocation2] sm:$0xff] %v312
    %329 = vst [vmem:[#allocation2 + $0x40] sm:$0xff] %v313
    %330 = vst [vmem:[#allocation2 + $0x8] sm:$0xff] %v314
    %331 = vst [vmem:[#allocation2 + $0x48] sm:$0xff] %v315
    %332 = vst [vmem:[#allocation2 + $0x10] sm:$0xff] %v316
    %333 = vst [vmem:[#allocation2 + $0x50] sm:$0xff] %v317
    %334 = vst [vmem:[#allocation2 + $0x18] sm:$0xff] %v318
    %335 = vst [vmem:[#allocation2 + $0x58] sm:$0xff] %v319
    %336 = vst [vmem:[#allocation2 + $0x20] sm:$0xff] %v320
    %337 = vst [vmem:[#allocation2 + $0x60] sm:$0xff] %v321
    %338 = vst [vmem:[#allocation2 + $0x28] sm:$0xff] %v322
    %339 = vst [vmem:[#allocation2 + $0x68] sm:$0xff] %v323
    %340 = vst [vmem:[#allocation2 + $0x30] sm:$0xff] %v324
    %341 = vst [vmem:[#allocation2 + $0x70] sm:$0xff] %v325
    %342 = vst [vmem:[#allocation2 + $0x38] sm:$0xff] %v326
    %343 = vst [vmem:[#allocation2 + $0x78] sm:$0xff] %v327
    %v344 = vld [vmem:[#allocation9] sm:$0xf]
    %v345 = vld [vmem:[#allocation9 + $0x4] sm:$0xf]
    %v346 = vld [vmem:[#allocation9 + $0x8] sm:$0xf]
    %v347 = vld [vmem:[#allocation9 + $0xc] sm:$0xf]
    %v348 = vld [vmem:[#allocation2] sm:$0xff]
    %v349 = vld [vmem:[#allocation2 + $0x8] sm:$0xff]
    %v350 = vld [vmem:[#allocation2 + $0x10] sm:$0xff]
    %v351 = vld [vmem:[#allocation2 + $0x18] sm:$0xff]
    %v352 = vld [vmem:[#allocation2 + $0x20] sm:$0xff]
    %v353 = vld [vmem:[#allocation2 + $0x28] sm:$0xff]
    %v354 = vld [vmem:[#allocation2 + $0x30] sm:$0xff]
    %v355 = vld [vmem:[#allocation2 + $0x38] sm:$0xff]
    %v356 = vld [vmem:[#allocation2 + $0x40] sm:$0xff]
    %v357 = vld [vmem:[#allocation2 + $0x48] sm:$0xff]
    %v358 = vld [vmem:[#allocation2 + $0x50] sm:$0xff]
    %v359 = vld [vmem:[#allocation2 + $0x58] sm:$0xff]
    %v360 = vld [vmem:[#allocation2 + $0x60] sm:$0xff]
    %v361 = vld [vmem:[#allocation2 + $0x68] sm:$0xff]
    %v362 = vld [vmem:[#allocation2 + $0x70] sm:$0xff]
    %v363 = vld [vmem:[#allocation2 + $0x78] sm:$0xff]
    %v368 = vunpack.c.l.b16 %v344
    %v369 = vunpack.c.l.b16 %v345
    %v370 = vunpack.c.l.b16 %v346
    %v371 = vunpack.c.l.b16 %v347
    %v372 = vpack.c.b16 %v369, %v368
    %v373 = vpack.c.b16 %v371, %v370
    %vm374 = vcmask 261120
    %v376 = vsel %vm374, %v372, 0
    %v379 = vsel %vm374, %v373, 0
    %381 = vmatprep.subr.bf16.mxu0 %v349
    %382 = vmatpush1.bf16.msra.mxu0 %v348
    %383 = vmatprep.subr.bf16.mxu0 %v357
    %384 = vmatpush1.bf16.msra.mxu0 %v356
    %385 = vmatprep.subr.bf16.mxu0 0
    %386 = vmatpush1.bf16.msra.mxu0 0
    %387 = vmatprep.subr.bf16.mxu0 0
    %388 = vmatpush1.bf16.msra.mxu0 0
    %389 = vmatprep.subr.bf16.mxu0 0
    %390 = vmatpush1.bf16.msra.mxu0 0
    %391 = vmatprep.subr.bf16.mxu0 0
    %392 = vmatpush1.bf16.msra.mxu0 0
    %393 = vmatprep.subr.bf16.mxu0 0
    %394 = vmatpush1.bf16.msra.mxu0 0
    %395 = vmatprep.subr.bf16.mxu0 0
    %396 = vmatpush1.bf16.msra.mxu0 0
    %397 = vmatprep.subr.bf16.mxu0 0
    %398 = vmatpush1.bf16.msra.mxu0 0
    %399 = vmatprep.subr.bf16.mxu0 0
    %400 = vmatpush1.bf16.msra.mxu0 0
    %401 = vmatprep.subr.bf16.mxu0 0
    %402 = vmatpush1.bf16.msra.mxu0 0
    %403 = vmatprep.subr.bf16.mxu0 0
    %404 = vmatpush1.bf16.msra.mxu0 0
    %405 = vmatprep.subr.bf16.mxu0 0
    %406 = vmatpush1.bf16.msra.mxu0 0
    %407 = vmatprep.subr.bf16.mxu0 0
    %408 = vmatpush1.bf16.msra.mxu0 0
    %409 = vmatprep.subr.bf16.mxu0 0
    %410 = vmatpush1.bf16.msra.mxu0 0
    %411 = vmatprep.subr.bf16.mxu0 0
    %412 = vmatpush1.bf16.msra.mxu0 0
    %413 = vmatprep.mubr.bf16.mxu0 0
    %414 = vmatmul.mubr.bf16.gmra.mrb[0].mxu0 %v376
    %v415 = vpop.f32.mrb[0].mxu0
    %v416 = vadd.f32 0.0, %v415
    %v417 = vpop.f32.mrb[0].mxu0
    %v418 = vadd.f32 0.0, %v417
    %v419 = vpop.f32.mrb[0].mxu0
    %v420 = vadd.f32 0.0, %v419
    %v421 = vpop.f32.mrb[0].mxu0
    %v422 = vadd.f32 0.0, %v421
    %423 = vmatprep.mubr.bf16.mxu0 0
    %424 = vmatmul.mubr.bf16.gmra.mrb[0].mxu0 %v379
    %v425 = vpop.f32.mrb[0].mxu0
    %v426 = vadd.f32 0.0, %v425
    %v427 = vpop.f32.mrb[0].mxu0
    %v428 = vadd.f32 0.0, %v427
    %v429 = vpop.f32.mrb[0].mxu0
    %v430 = vadd.f32 0.0, %v429
    %v431 = vpop.f32.mrb[0].mxu0
    %v432 = vadd.f32 0.0, %v431
    %433 = vdwg.mxu0
    %434 = vmatprep.subr.bf16.mxu0 %v351
    %435 = vmatpush1.bf16.msra.mxu0 %v350
    %436 = vmatprep.subr.bf16.mxu0 %v359
    %437 = vmatpush1.bf16.msra.mxu0 %v358
    %438 = vmatprep.subr.bf16.mxu0 0
    %439 = vmatpush1.bf16.msra.mxu0 0
    %440 = vmatprep.subr.bf16.mxu0 0
    %441 = vmatpush1.bf16.msra.mxu0 0
    %442 = vmatprep.subr.bf16.mxu0 0
    %443 = vmatpush1.bf16.msra.mxu0 0
    %444 = vmatprep.subr.bf16.mxu0 0
    %445 = vmatpush1.bf16.msra.mxu0 0
    %446 = vmatprep.subr.bf16.mxu0 0
    %447 = vmatpush1.bf16.msra.mxu0 0
    %448 = vmatprep.subr.bf16.mxu0 0
    %449 = vmatpush1.bf16.msra.mxu0 0
    %450 = vmatprep.subr.bf16.mxu0 0
    %451 = vmatpush1.bf16.msra.mxu0 0
    %452 = vmatprep.subr.bf16.mxu0 0
    %453 = vmatpush1.bf16.msra.mxu0 0
    %454 = vmatprep.subr.bf16.mxu0 0
    %455 = vmatpush1.bf16.msra.mxu0 0
    %456 = vmatprep.subr.bf16.mxu0 0
    %457 = vmatpush1.bf16.msra.mxu0 0
    %458 = vmatprep.subr.bf16.mxu0 0
    %459 = vmatpush1.bf16.msra.mxu0 0
    %460 = vmatprep.subr.bf16.mxu0 0
    %461 = vmatpush1.bf16.msra.mxu0 0
    %462 = vmatprep.subr.bf16.mxu0 0
    %463 = vmatpush1.bf16.msra.mxu0 0
    %464 = vmatprep.subr.bf16.mxu0 0
    %465 = vmatpush1.bf16.msra.mxu0 0
    %466 = vmatprep.mubr.bf16.mxu0 0
    %467 = vmatmul.mubr.bf16.gmra.mrb[0].mxu0 %v376
    %v468 = vpop.f32.mrb[0].mxu0
    %v469 = vadd.f32 0.0, %v468
    %v470 = vpop.f32.mrb[0].mxu0
    %v471 = vadd.f32 0.0, %v470
    %v472 = vpop.f32.mrb[0].mxu0
    %v473 = vadd.f32 0.0, %v472
    %v474 = vpop.f32.mrb[0].mxu0
    %v475 = vadd.f32 0.0, %v474
    %476 = vmatprep.mubr.bf16.mxu0 0
    %477 = vmatmul.mubr.bf16.gmra.mrb[0].mxu0 %v379
    %v478 = vpop.f32.mrb[0].mxu0
    %v479 = vadd.f32 0.0, %v478
    %v480 = vpop.f32.mrb[0].mxu0
    %v481 = vadd.f32 0.0, %v480
    %v482 = vpop.f32.mrb[0].mxu0
    %v483 = vadd.f32 0.0, %v482
    %v484 = vpop.f32.mrb[0].mxu0
    %v485 = vadd.f32 0.0, %v484
    %486 = vdwg.mxu0
    %487 = vmatprep.subr.bf16.mxu0 %v353
    %488 = vmatpush1.bf16.msra.mxu0 %v352
    %489 = vmatprep.subr.bf16.mxu0 %v361
    %490 = vmatpush1.bf16.msra.mxu0 %v360
    %491 = vmatprep.subr.bf16.mxu0 0
    %492 = vmatpush1.bf16.msra.mxu0 0
    %493 = vmatprep.subr.bf16.mxu0 0
    %494 = vmatpush1.bf16.msra.mxu0 0
    %495 = vmatprep.subr.bf16.mxu0 0
    %496 = vmatpush1.bf16.msra.mxu0 0
    %497 = vmatprep.subr.bf16.mxu0 0
    %498 = vmatpush1.bf16.msra.mxu0 0
    %499 = vmatprep.subr.bf16.mxu0 0
    %500 = vmatpush1.bf16.msra.mxu0 0
    %501 = vmatprep.subr.bf16.mxu0 0
    %502 = vmatpush1.bf16.msra.mxu0 0
    %503 = vmatprep.subr.bf16.mxu0 0
    %504 = vmatpush1.bf16.msra.mxu0 0
    %505 = vmatprep.subr.bf16.mxu0 0
    %506 = vmatpush1.bf16.msra.mxu0 0
    %507 = vmatprep.subr.bf16.mxu0 0
    %508 = vmatpush1.bf16.msra.mxu0 0
    %509 = vmatprep.subr.bf16.mxu0 0
    %510 = vmatpush1.bf16.msra.mxu0 0
    %511 = vmatprep.subr.bf16.mxu0 0
    %512 = vmatpush1.bf16.msra.mxu0 0
    %513 = vmatprep.subr.bf16.mxu0 0
    %514 = vmatpush1.bf16.msra.mxu0 0
    %515 = vmatprep.subr.bf16.mxu0 0
    %516 = vmatpush1.bf16.msra.mxu0 0
    %517 = vmatprep.subr.bf16.mxu0 0
    %518 = vmatpush1.bf16.msra.mxu0 0
    %519 = vmatprep.mubr.bf16.mxu0 0
    %520 = vmatmul.mubr.bf16.gmra.mrb[0].mxu0 %v376
    %v521 = vpop.f32.mrb[0].mxu0
    %v522 = vadd.f32 0.0, %v521
    %v523 = vpop.f32.mrb[0].mxu0
    %v524 = vadd.f32 0.0, %v523
    %v525 = vpop.f32.mrb[0].mxu0
    %v526 = vadd.f32 0.0, %v525
    %v527 = vpop.f32.mrb[0].mxu0
    %v528 = vadd.f32 0.0, %v527
    %529 = vmatprep.mubr.bf16.mxu0 0
    %530 = vmatmul.mubr.bf16.gmra.mrb[0].mxu0 %v379
    %v531 = vpop.f32.mrb[0].mxu0
    %v532 = vadd.f32 0.0, %v531
    %v533 = vpop.f32.mrb[0].mxu0
    %v534 = vadd.f32 0.0, %v533
    %v535 = vpop.f32.mrb[0].mxu0
    %v536 = vadd.f32 0.0, %v535
    %v537 = vpop.f32.mrb[0].mxu0
    %v538 = vadd.f32 0.0, %v537
    %539 = vdwg.mxu0
    %540 = vmatprep.subr.bf16.mxu0 %v355
    %541 = vmatpush1.bf16.msra.mxu0 %v354
    %542 = vmatprep.subr.bf16.mxu0 %v363
    %543 = vmatpush1.bf16.msra.mxu0 %v362
    %544 = vmatprep.subr.bf16.mxu0 0
    %545 = vmatpush1.bf16.msra.mxu0 0
    %546 = vmatprep.subr.bf16.mxu0 0
    %547 = vmatpush1.bf16.msra.mxu0 0
    %548 = vmatprep.subr.bf16.mxu0 0
    %549 = vmatpush1.bf16.msra.mxu0 0
    %550 = vmatprep.subr.bf16.mxu0 0
    %551 = vmatpush1.bf16.msra.mxu0 0
    %552 = vmatprep.subr.bf16.mxu0 0
    %553 = vmatpush1.bf16.msra.mxu0 0
    %554 = vmatprep.subr.bf16.mxu0 0
    %555 = vmatpush1.bf16.msra.mxu0 0
    %556 = vmatprep.subr.bf16.mxu0 0
    %557 = vmatpush1.bf16.msra.mxu0 0
    %558 = vmatprep.subr.bf16.mxu0 0
    %559 = vmatpush1.bf16.msra.mxu0 0
    %560 = vmatprep.subr.bf16.mxu0 0
    %561 = vmatpush1.bf16.msra.mxu0 0
    %562 = vmatprep.subr.bf16.mxu0 0
    %563 = vmatpush1.bf16.msra.mxu0 0
    %564 = vmatprep.subr.bf16.mxu0 0
    %565 = vmatpush1.bf16.msra.mxu0 0
    %566 = vmatprep.subr.bf16.mxu0 0
    %567 = vmatpush1.bf16.msra.mxu0 0
    %568 = vmatprep.subr.bf16.mxu0 0
    %569 = vmatpush1.bf16.msra.mxu0 0
    %570 = vmatprep.subr.bf16.mxu0 0
    %571 = vmatpush1.bf16.msra.mxu0 0
    %572 = vmatprep.mubr.bf16.mxu0 0
    %573 = vmatmul.mubr.bf16.gmra.mrb[0].mxu0 %v376
    %v574 = vpop.f32.mrb[0].mxu0
    %v575 = vadd.f32 0.0, %v574
    %v576 = vpop.f32.mrb[0].mxu0
    %v577 = vadd.f32 0.0, %v576
    %v578 = vpop.f32.mrb[0].mxu0
    %v579 = vadd.f32 0.0, %v578
    %v580 = vpop.f32.mrb[0].mxu0
    %v581 = vadd.f32 0.0, %v580
    %582 = vmatprep.mubr.bf16.mxu0 0
    %583 = vmatmul.mubr.bf16.gmra.mrb[0].mxu0 %v379
    %v584 = vpop.f32.mrb[0].mxu0
    %v585 = vadd.f32 0.0, %v584
    %v586 = vpop.f32.mrb[0].mxu0
    %v587 = vadd.f32 0.0, %v586
    %v588 = vpop.f32.mrb[0].mxu0
    %v589 = vadd.f32 0.0, %v588
    %v590 = vpop.f32.mrb[0].mxu0
    %v591 = vadd.f32 0.0, %v590
    %592 = vdwg.mxu0
    %v593 = vand.u32 2147483647, %v416
    %v594 = vand.u32 2147483647, %v418
    %v595 = vand.u32 2147483647, %v469
    %v596 = vand.u32 2147483647, %v471
    %v597 = vand.u32 2147483647, %v522
    %v598 = vand.u32 2147483647, %v524
    %v599 = vand.u32 2147483647, %v575
    %v600 = vand.u32 2147483647, %v577
    %v601 = vand.u32 2147483647, %v420
    %v602 = vand.u32 2147483647, %v422
    %v603 = vand.u32 2147483647, %v473
    %v604 = vand.u32 2147483647, %v475
    %v605 = vand.u32 2147483647, %v526
    %v606 = vand.u32 2147483647, %v528
    %v607 = vand.u32 2147483647, %v579
    %v608 = vand.u32 2147483647, %v581
    %v609 = vand.u32 2147483647, %v426
    %v610 = vand.u32 2147483647, %v428
    %v611 = vand.u32 2147483647, %v479
    %v612 = vand.u32 2147483647, %v481
    %v613 = vand.u32 2147483647, %v532
    %v614 = vand.u32 2147483647, %v534
    %v615 = vand.u32 2147483647, %v585
    %v616 = vand.u32 2147483647, %v587
    %v617 = vand.u32 2147483647, %v430
    %v618 = vand.u32 2147483647, %v432
    %v619 = vand.u32 2147483647, %v483
    %v620 = vand.u32 2147483647, %v485
    %v621 = vand.u32 2147483647, %v536
    %v622 = vand.u32 2147483647, %v538
    %v623 = vand.u32 2147483647, %v589
    %v624 = vand.u32 2147483647, %v591
    %v625 = vadd.f32 %v593, %v594
    %v626 = vadd.f32 %v625, %v595
    %v627 = vadd.f32 %v626, %v596
    %v628 = vadd.f32 %v627, %v597
    %v629 = vadd.f32 %v628, %v598
    %v630 = vadd.f32 %v629, %v599
    %v631 = vadd.f32 %v630, %v600
    %v632 = vadd.f32 %v631, %v601
    %v633 = vadd.f32 %v632, %v602
    %v634 = vadd.f32 %v633, %v603
    %v635 = vadd.f32 %v634, %v604
    %v636 = vadd.f32 %v635, %v605
    %v637 = vadd.f32 %v636, %v606
    %v638 = vadd.f32 %v637, %v607
    %v639 = vadd.f32 %v638, %v608
    %v640 = vadd.f32 %v639, %v609
    %v641 = vadd.f32 %v640, %v610
    %v642 = vadd.f32 %v641, %v611
    %v643 = vadd.f32 %v642, %v612
    %v644 = vadd.f32 %v643, %v613
    %v645 = vadd.f32 %v644, %v614
    %v646 = vadd.f32 %v645, %v615
    %v647 = vadd.f32 %v646, %v616
    %v648 = vadd.f32 %v647, %v617
    %v649 = vadd.f32 %v648, %v618
    %v650 = vadd.f32 %v649, %v619
    %v651 = vadd.f32 %v650, %v620
    %v652 = vadd.f32 %v651, %v621
    %v653 = vadd.f32 %v652, %v622
    %v654 = vadd.f32 %v653, %v623
    %v655 = vadd.f32 %v654, %v624
    %656 = vadd.xlane.f32.xlu0 %v655
    %v657 = vpop.xlane.xlu0 %656
    %v658 = vrot.slane %v657, 4
    %v659 = vadd.f32 %v657, %v658
    %v660 = vrot.slane %v659, 2
    %v661 = vadd.f32 %v659, %v660
    %v662 = vrot.slane %v661, 1
    %v663 = vadd.f32 %v661, %v662
    %s664 = vtos %v663
    %v665 = vstv %s664
    %666 = vst [vmem:[#allocation11] sm:$0x1] %v665
    // Predicated region
    $region34: #{tpu_custom_call.1} parent=1 // pred_check
      _
    $region35: #{tpu_custom_call.1} parent=1 // pred_check_branch
      %668 = sbr.rel (0) target = $region37
    $region36: #{tpu_custom_call.1} parent=1 // pred_region
      %s670 = ssub.s32 16, 16
      %671 = vsyncadd [#allocation5], %s670
      %s673 = sshll.u32 [#allocation11], 4
      %s674 = int_to_ptr.vmem [resolvable:$true] %s673
      %676 = dma.vmem_to_hbm [thread:$0]  %s674, 16, %s4, [#allocation5]
    $region37: #{tpu_custom_call.1} parent=1 // pred_fallthru
      _
    // Predicated region
    $region38: #{tpu_custom_call.1} parent=1 // pred_check
      _
    $region39: #{tpu_custom_call.1} parent=1 // pred_check_branch
      %678 = sbr.rel (0) target = $region41
    $region40: #{tpu_custom_call.1} parent=1 // pred_region
      %679 = dma.done [#allocation5], 16
    $region41: #{tpu_custom_call.1} parent=1 // pred_fallthru
      _
    %680 = vsyncpa [#allocation4], 1
    %681 = vsyncpa [#allocation7], 1
    %682 = vsyncpa [#allocation10], 1
    %683 = vsyncpa [#allocation5], 1

</llo_original>
